<compile_context>
chip_gen: v7x
topology: tpu7x:2x2x1
jax: 0.10.0
libtpu: 0.0.40
codegen_flags: <defaults>
</compile_context>

<pallas_src>
import jax
import jax.numpy as jnp
from jax.experimental import pallas as pl
from jax.experimental.pallas import tpu as pltpu

IN_F = 896
HID_F = 224
OUT_F = 2


# ---------------------------------------------------------------------------
# Fused kernel: x @ W6 + b6 -> ReLU -> @ W7 + b7 -> Softmax(dim=1)
# ---------------------------------------------------------------------------
def _domain_critic_kernel(x_ref, w6_ref, b6_ref, w7_ref, b7_ref, o_ref):
    # l6: Linear + ReLU  (hidden stays on-chip, never written to HBM)
    h = jnp.dot(x_ref[...], w6_ref[...], preferred_element_type=jnp.float32)
    h = jnp.maximum(h + b6_ref[...], 0.0)
    # l7: Linear
    logits = jnp.dot(h, w7_ref[...], preferred_element_type=jnp.float32)
    logits = logits + b7_ref[...]
    # Softmax(1), max-subtracted; reciprocal of the denominator on the EUP slot.
    m = jnp.max(logits, axis=-1, keepdims=True)
    e = jnp.exp(logits - m)
    denom = jnp.sum(e, axis=-1, keepdims=True)
    o_ref[...] = (e * pl.reciprocal(denom, approx=True)).astype(o_ref.dtype)


def domain_critic_forward(params, x, *, tm=256):
    """x: (N, 896) float32 -> (N, 2) softmax probabilities (matches DomainCritic.forward)."""
    n, k = x.shape
    assert k == IN_F, x.shape

    # Row tile: multiple of 8 sublanes; shrink for tiny batches, pad N to a tile multiple.
    tm = max(8, min(tm, ((n + 7) // 8) * 8))
    n_pad = ((n + tm - 1) // tm) * tm
    if n_pad != n:
        x = jnp.pad(x, ((0, n_pad - n), (0, 0)))

    # PyTorch Linear stores weight as (out, in); kernel consumes (in, out).
    w6 = params["w6"].T                     # (896, 224)
    b6 = params["b6"].reshape(1, HID_F)     # (1, 224)
    w7 = params["w7"].T                     # (224, 2)
    b7 = params["b7"].reshape(1, OUT_F)     # (1, 2)

    grid = (n_pad // tm,)
    flops = 2 * n_pad * IN_F * HID_F + 2 * n_pad * HID_F * OUT_F
    bytes_accessed = 4 * (n_pad * IN_F + IN_F * HID_F + HID_F
                          + HID_F * OUT_F + OUT_F + n_pad * OUT_F)

    out = pl.pallas_call(
        _domain_critic_kernel,
        out_shape=jax.ShapeDtypeStruct((n_pad, OUT_F), jnp.float32),
        grid_spec=pltpu.PrefetchScalarGridSpec(
            num_scalar_prefetch=0,
            grid=grid,
            in_specs=[
                pl.BlockSpec((tm, IN_F), lambda i: (i, 0)),      # x row tile
                pl.BlockSpec((IN_F, HID_F), lambda i: (0, 0)),   # W6 (full)
                pl.BlockSpec((1, HID_F), lambda i: (0, 0)),      # b6 (full)
                pl.BlockSpec((HID_F, OUT_F), lambda i: (0, 0)),  # W7 (full)
                pl.BlockSpec((1, OUT_F), lambda i: (0, 0)),      # b7 (full)
            ],
            out_specs=pl.BlockSpec((tm, OUT_F), lambda i: (i, 0)),
        ),
        compiler_params=pltpu.CompilerParams(
            dimension_semantics=("parallel",),
            vmem_limit_bytes=64 * 1024 * 1024,
        ),
        cost_estimate=pl.CostEstimate(
            flops=flops,
            transcendentals=n_pad * OUT_F,
            bytes_accessed=bytes_accessed,
        ),
    )(x, w6, b6, w7, b7)
    return out[:n]


# ---------------------------------------------------------------------------
# Parameters (deterministic, PyTorch-like uniform(-1/sqrt(fan_in), 1/sqrt(fan_in)))
# ---------------------------------------------------------------------------
def init_params(key):
    def u(k, shape, fan_in):
        bound = 1.0 / jnp.sqrt(jnp.float32(fan_in))
        return jax.random.uniform(k, shape, jnp.float32, -bound, bound)

    ks = jax.random.split(key, 4)
    return {
        "w6": u(ks[0], (HID_F, IN_F), IN_F),   # l6.weight (224, 896)
        "b6": u(ks[1], (HID_F,), IN_F),        # l6.bias
        "w7": u(ks[2], (OUT_F, HID_F), HID_F),  # l7.weight (2, 224)
        "b7": u(ks[3], (OUT_F,), HID_F),        # l7.bias
    }


if __name__ == "__main__":
    key = jax.random.PRNGKey(0)
    pkey, dkey = jax.random.split(key)
    params = init_params(pkey)

    # DomainCritic consumes the 896-dim flattened feature vector.
    batch = 2
    data = jax.random.normal(dkey, (batch, IN_F), jnp.float32)

    out = jax.jit(domain_critic_forward)(params, data)
    out = jax.block_until_ready(out)

    assert out.shape == (batch, OUT_F), out.shape
    # Rows must be (approximately — approx reciprocal) probability distributions.
    assert bool(jnp.all(jnp.isfinite(out)))
    assert bool(jnp.allclose(jnp.sum(out, axis=1), 1.0, atol=2e-3))
    print("KERNEL_OK")
</pallas_src>

<mosaic_0001>
module attributes {stable_mosaic.version = 11 : i64} {
  func.func @_domain_critic_kernel(%arg0: i32, %arg1: memref<8x896xf32, #tpu.memory_space<vmem>>, %arg2: memref<896x224xf32, #tpu.memory_space<vmem>>, %arg3: memref<1x224xf32, #tpu.memory_space<vmem>>, %arg4: memref<224x2xf32, #tpu.memory_space<vmem>>, %arg5: memref<1x2xf32, #tpu.memory_space<vmem>>, %arg6: memref<8x2xf32, #tpu.memory_space<vmem>>) attributes {dimension_semantics = [#tpu.dimension_semantics<parallel>], iteration_bounds = array<i64: 1>, scalar_prefetch = 0 : i64, scratch_operands = 0 : i64, tpu.core_type = #tpu.core_type<tc>, window_params = [{transform_indices = @transform_0, window_bounds = array<i64: 8, 896>}, {pipeline_mode = #tpu.pipeline_mode<synchronous>, transform_indices = @transform_1, window_bounds = array<i64: 896, 224>}, {pipeline_mode = #tpu.pipeline_mode<synchronous>, transform_indices = @transform_2, window_bounds = array<i64: 1, 224>}, {pipeline_mode = #tpu.pipeline_mode<synchronous>, transform_indices = @transform_3, window_bounds = array<i64: 224, 2>}, {pipeline_mode = #tpu.pipeline_mode<synchronous>, transform_indices = @transform_4, window_bounds = array<i64: 1, 2>}, {transform_indices = @transform_5, window_bounds = array<i64: 8, 2>}]} {
    %c0 = arith.constant 0 : index
    %c0_0 = arith.constant 0 : index
    %0 = vector.load %arg1[%c0, %c0_0] : memref<8x896xf32, #tpu.memory_space<vmem>>, vector<8x896xf32>
    %c0_1 = arith.constant 0 : index
    %c0_2 = arith.constant 0 : index
    %1 = vector.load %arg2[%c0_1, %c0_2] : memref<896x224xf32, #tpu.memory_space<vmem>>, vector<896x224xf32>
    %cst = arith.constant dense<0.000000e+00> : vector<8x224xf32>
    %2 = tpu.matmul %0, %1, %cst {dimension_numbers = #tpu.dot_dimension_numbers<[1], [0], [0], [1], [0, 0, 1, 1], [], []>} : vector<8x896xf32>, vector<896x224xf32>, vector<8x224xf32> -> vector<8x224xf32>
    %c0_3 = arith.constant 0 : index
    %c0_4 = arith.constant 0 : index
    %3 = vector.load %arg3[%c0_3, %c0_4] : memref<1x224xf32, #tpu.memory_space<vmem>>, vector<1x224xf32>
    %4 = vector.broadcast %3 : vector<1x224xf32> to vector<8x224xf32>
    %5 = arith.addf %2, %4 : vector<8x224xf32>
    %cst_5 = arith.constant 0.000000e+00 : f32
    %6 = vector.broadcast %cst_5 : f32 to vector<8x224xf32>
    %7 = arith.maximumf %5, %6 : vector<8x224xf32>
    %c0_6 = arith.constant 0 : index
    %c0_7 = arith.constant 0 : index
    %8 = vector.load %arg4[%c0_6, %c0_7] : memref<224x2xf32, #tpu.memory_space<vmem>>, vector<224x2xf32>
    %cst_8 = arith.constant dense<0.000000e+00> : vector<8x2xf32>
    %9 = tpu.matmul %7, %8, %cst_8 {dimension_numbers = #tpu.dot_dimension_numbers<[1], [0], [0], [1], [0, 0, 1, 1], [], []>} : vector<8x224xf32>, vector<224x2xf32>, vector<8x2xf32> -> vector<8x2xf32>
    %c0_9 = arith.constant 0 : index
    %c0_10 = arith.constant 0 : index
    %10 = vector.load %arg5[%c0_9, %c0_10] : memref<1x2xf32, #tpu.memory_space<vmem>>, vector<1x2xf32>
    %11 = vector.broadcast %10 : vector<1x2xf32> to vector<8x2xf32>
    %12 = arith.addf %9, %11 : vector<8x2xf32>
    %cst_11 = arith.constant dense<0xFF800000> : vector<8xf32>
    %13 = vector.multi_reduction <maximumf>, %12, %cst_11 [1] : vector<8x2xf32> to vector<8xf32>
    %14 = vector.shape_cast %13 : vector<8xf32> to vector<8x1xf32>
    %15 = vector.broadcast %14 : vector<8x1xf32> to vector<8x2xf32>
    %16 = arith.subf %12, %15 : vector<8x2xf32>
    %17 = math.exp %16 : vector<8x2xf32>
    %cst_12 = arith.constant dense<0.000000e+00> : vector<8xf32>
    %18 = vector.multi_reduction <add>, %17, %cst_12 [1] : vector<8x2xf32> to vector<8xf32>
    %19 = vector.shape_cast %18 : vector<8xf32> to vector<8x1xf32>
    %20 = tpu.reciprocal %19 {approx = true} : vector<8x1xf32> -> vector<8x1xf32>
    %21 = vector.broadcast %20 : vector<8x1xf32> to vector<8x2xf32>
    %22 = arith.mulf %17, %21 : vector<8x2xf32>
    %c0_13 = arith.constant 0 : index
    %c0_14 = arith.constant 0 : index
    %23 = vector.load %arg6[%c0_13, %c0_14] : memref<8x2xf32, #tpu.memory_space<vmem>>, vector<8x2xf32>
    tpu.vector_store %arg6[%c0_13, %c0_14], %22 {strides = array<i32>} : memref<8x2xf32, #tpu.memory_space<vmem>>, vector<8x2xf32>,
    return
  }
  func.func @transform_0(%arg0: i32) -> (i32, i32) {
    %c0_i32 = arith.constant 0 : i32
    %c0_i32_0 = arith.constant 0 : i32
    return %arg0, %c0_i32 : i32, i32
  }
  func.func @transform_1(%arg0: i32) -> (i32, i32) {
    %c0_i32 = arith.constant 0 : i32
    %c0_i32_0 = arith.constant 0 : i32
    %c0_i32_1 = arith.constant 0 : i32
    return %c0_i32, %c0_i32_0 : i32, i32
  }
  func.func @transform_2(%arg0: i32) -> (i32, i32) {
    %c0_i32 = arith.constant 0 : i32
    %c0_i32_0 = arith.constant 0 : i32
    %c0_i32_1 = arith.constant 0 : i32
    return %c0_i32, %c0_i32_0 : i32, i32
  }
  func.func @transform_3(%arg0: i32) -> (i32, i32) {
    %c0_i32 = arith.constant 0 : i32
    %c0_i32_0 = arith.constant 0 : i32
    %c0_i32_1 = arith.constant 0 : i32
    return %c0_i32, %c0_i32_0 : i32, i32
  }
  func.func @transform_4(%arg0: i32) -> (i32, i32) {
    %c0_i32 = arith.constant 0 : i32
    %c0_i32_0 = arith.constant 0 : i32
    %c0_i32_1 = arith.constant 0 : i32
    return %c0_i32, %c0_i32_0 : i32, i32
  }
  func.func @transform_5(%arg0: i32) -> (i32, i32) {
    %c0_i32 = arith.constant 0 : i32
    %c0_i32_0 = arith.constant 0 : i32
    return %arg0, %c0_i32 : i32, i32
  }
}

</mosaic_0001>

<llo_original>
// kernel: domain_critic_forward.1
$region0: #{domain_critic_forward.1}
  #allocation0 [shape = 'u32[]', space=smem, size = 0x4, offset = 0x4, fixed_abs, tag = 'smem constant byte address 0x4 - core index']
  #allocation1 [shape = 'u32[144,128]{1,0:T(1,128)}', space=vmem, size = 0x12000, scoped, tag = 'internal scratch']
  %s0 = inlined_call_operand.hbm [shape: f32[8,896], index: 0, kind: input, shape index: {}]
  %s1 = inlined_call_operand.hbm [shape: f32[896,224], index: 1, kind: input, shape index: {}]
  %s2 = inlined_call_operand.hbm [shape: f32[1,224], index: 2, kind: input, shape index: {}]
  %s3 = inlined_call_operand.hbm [shape: f32[224,2], index: 3, kind: input, shape index: {}]
  %s4 = inlined_call_operand.hbm [shape: f32[1,2], index: 4, kind: input, shape index: {}]
  %s5 = inlined_call_operand.hbm [shape: f32[8,2], index: 5, kind: output, shape index: {}]
  %s6 = sld [smem:[#allocation0]]
  $region50: #{domain_critic_forward.1} parent=0
    _
  %s8 = ssub.s32 1, %s6
  %s9 = scalar_select 0, %s8, %s6
  $region1: #{domain_critic_forward.1} parent=0
    #allocation2 [shape = 'u8[28672]{0}', space=vmem, size = 0x7000, scoped, tag = 'input window, operand 0, single buffered']
    #allocation3 [shape = 's32[1]{0}', space=sflag, size = 0x4, scoped, tag = 'scoped memory for domain_critic_forward.1']
    #allocation4 [shape = 's32[1]{0}', space=sflag, size = 0x4, scoped, tag = 'scoped memory for domain_critic_forward.1']
    #allocation5 [shape = 'u8[917504]{0}', space=vmem, size = 0xe0000, scoped, tag = 'input window, operand 1, single buffered']
    #allocation6 [shape = 's32[1]{0}', space=sflag, size = 0x4, scoped, tag = 'scoped memory for domain_critic_forward.1']
    #allocation7 [shape = 'u8[1024]{0}', space=vmem, size = 0x400, scoped, tag = 'input window, operand 2, single buffered']
    #allocation8 [shape = 'u8[114688]{0}', space=vmem, size = 0x1c000, scoped, tag = 'input window, operand 3, single buffered']
    #allocation9 [shape = 's32[1]{0}', space=sflag, size = 0x4, scoped, tag = 'scoped memory for domain_critic_forward.1']
    #allocation10 [shape = 'u8[512]{0}', space=vmem, size = 0x400, scoped, tag = 'input window, operand 4, single buffered']
    #allocation11 [shape = 'u8[4096]{0}', space=vmem, size = 0x1000, scoped, tag = 'output window, operand 0, single buffered']
    %10 = vsyncpa [#allocation3], 0
    %11 = vsyncpa [#allocation6], 0
    %12 = vsyncpa [#allocation9], 0
    %13 = vsyncpa [#allocation4], 0
    // Predicated region
    $region2: #{domain_critic_forward.1} parent=1 // pred_check
      _
    $region3: #{domain_critic_forward.1} parent=1 // pred_check_branch
      %15 = sbr.rel (0) target = $region5
    $region4: #{domain_critic_forward.1} parent=1 // pred_region
      %s17 = ssub.s32 896, 896
      %18 = vsyncadd [#allocation3], %s17
      %s20 = sshll.u32 [#allocation2], 4
      %s21 = int_to_ptr.vmem [resolvable:$true] %s20
      %23 = dma.hbm_to_vmem [thread:$0]  %s0, 896, %s21, [#allocation3]
    $region5: #{domain_critic_forward.1} parent=1 // pred_fallthru
      _
    // Predicated region
    $region6: #{domain_critic_forward.1} parent=1 // pred_check
      _
    $region7: #{domain_critic_forward.1} parent=1 // pred_check_branch
      %25 = sbr.rel (0) target = $region9
    $region8: #{domain_critic_forward.1} parent=1 // pred_region
      %s27 = ssub.s32 28672, 28672
      %28 = vsyncadd [#allocation6], %s27
      %s29 = sshll.u32 [#allocation5], 4
      %s30 = int_to_ptr.vmem [resolvable:$true] %s29
      %35 = dma.hbm_to_vmem [thread:$0]  %s1, 28672, %s30, [#allocation6], 256, 256, 16
    $region9: #{domain_critic_forward.1} parent=1 // pred_fallthru
      _
    // Predicated region
    $region10: #{domain_critic_forward.1} parent=1 // pred_check
      _
    $region11: #{domain_critic_forward.1} parent=1 // pred_check_branch
      %37 = sbr.rel (0) target = $region13
    $region12: #{domain_critic_forward.1} parent=1 // pred_region
      %s39 = ssub.s32 32, 32
      %40 = vsyncadd [#allocation6], %s39
      %s42 = sshll.u32 [#allocation7], 4
      %s43 = int_to_ptr.vmem [resolvable:$true] %s42
      %45 = dma.hbm_to_vmem [thread:$0]  %s2, 32, %s43, [#allocation6]
    $region13: #{domain_critic_forward.1} parent=1 // pred_fallthru
      _
    // Predicated region
    $region14: #{domain_critic_forward.1} parent=1 // pred_check
      _
    $region15: #{domain_critic_forward.1} parent=1 // pred_check_branch
      %47 = sbr.rel (0) target = $region17
    $region16: #{domain_critic_forward.1} parent=1 // pred_region
      %s49 = ssub.s32 3584, 3584
      %50 = vsyncadd [#allocation9], %s49
      %s51 = sshll.u32 [#allocation8], 4
      %s52 = int_to_ptr.vmem [resolvable:$true] %s51
      %57 = dma.hbm_to_vmem [thread:$0]  %s3, 3584, %s52, [#allocation9], 128, 128, 8
    $region17: #{domain_critic_forward.1} parent=1 // pred_fallthru
      _
    // Predicated region
    $region18: #{domain_critic_forward.1} parent=1 // pred_check
      _
    $region19: #{domain_critic_forward.1} parent=1 // pred_check_branch
      %59 = sbr.rel (0) target = $region21
    $region20: #{domain_critic_forward.1} parent=1 // pred_region
      %s61 = ssub.s32 16, 16
      %62 = vsyncadd [#allocation9], %s61
      %s64 = sshll.u32 [#allocation10], 4
      %s65 = int_to_ptr.vmem [resolvable:$true] %s64
      %67 = dma.hbm_to_vmem [thread:$0]  %s4, 16, %s65, [#allocation9]
    $region21: #{domain_critic_forward.1} parent=1 // pred_fallthru
      _
    // Predicated region
    $region22: #{domain_critic_forward.1} parent=1 // pred_check
      _
    $region23: #{domain_critic_forward.1} parent=1 // pred_check_branch
      %69 = sbr.rel (0) target = $region25
    $region24: #{domain_critic_forward.1} parent=1 // pred_region
      %70 = dma.done [#allocation3], 896
    $region25: #{domain_critic_forward.1} parent=1 // pred_fallthru
      _
    // Predicated region
    $region26: #{domain_critic_forward.1} parent=1 // pred_check
      _
    $region27: #{domain_critic_forward.1} parent=1 // pred_check_branch
      %72 = sbr.rel (0) target = $region29
    $region28: #{domain_critic_forward.1} parent=1 // pred_region
      %73 = dma.done [#allocation6], 28672
    $region29: #{domain_critic_forward.1} parent=1 // pred_fallthru
      _
    // Predicated region
    $region30: #{domain_critic_forward.1} parent=1 // pred_check
      _
    $region31: #{domain_critic_forward.1} parent=1 // pred_check_branch
      %75 = sbr.rel (0) target = $region33
    $region32: #{domain_critic_forward.1} parent=1 // pred_region
      %76 = dma.done [#allocation6], 32
    $region33: #{domain_critic_forward.1} parent=1 // pred_fallthru
      _
    // Predicated region
    $region34: #{domain_critic_forward.1} parent=1 // pred_check
      _
    $region35: #{domain_critic_forward.1} parent=1 // pred_check_branch
      %78 = sbr.rel (0) target = $region37
    $region36: #{domain_critic_forward.1} parent=1 // pred_region
      %79 = dma.done [#allocation9], 3584
    $region37: #{domain_critic_forward.1} parent=1 // pred_fallthru
      _
    // Predicated region
    $region38: #{domain_critic_forward.1} parent=1 // pred_check
      _
    $region39: #{domain_critic_forward.1} parent=1 // pred_check_branch
      %81 = sbr.rel (0) target = $region41
    $region40: #{domain_critic_forward.1} parent=1 // pred_region
      %82 = dma.done [#allocation9], 16
    $region41: #{domain_critic_forward.1} parent=1 // pred_fallthru
      _
    %v83 = vld [vmem:[#allocation2] sm:$0xff]
    %v84 = vld [vmem:[#allocation2 + $0x8] sm:$0xff]
    %v85 = vld [vmem:[#allocation2 + $0x10] sm:$0xff]
    %v86 = vld [vmem:[#allocation2 + $0x18] sm:$0xff]
    %v87 = vld [vmem:[#allocation2 + $0x20] sm:$0xff]
    %v88 = vld [vmem:[#allocation2 + $0x28] sm:$0xff]
    %v89 = vld [vmem:[#allocation2 + $0x30] sm:$0xff]
    %v90 = vld [vmem:[#allocation5] sm:$0xff]
    %v91 = vld [vmem:[#allocation5 + $0x8] sm:$0xff]
    %v92 = vld [vmem:[#allocation5 + $0x10] sm:$0xff]
    %v93 = vld [vmem:[#allocation5 + $0x18] sm:$0xff]
    %v94 = vld [vmem:[#allocation5 + $0x20] sm:$0xff]
    %v95 = vld [vmem:[#allocation5 + $0x28] sm:$0xff]
    %v96 = vld [vmem:[#allocation5 + $0x30] sm:$0xff]
    %v97 = vld [vmem:[#allocation5 + $0x38] sm:$0xff]
    %v98 = vld [vmem:[#allocation5 + $0x40] sm:$0xff]
    %v99 = vld [vmem:[#allocation5 + $0x48] sm:$0xff]
    %v100 = vld [vmem:[#allocation5 + $0x50] sm:$0xff]
    %v101 = vld [vmem:[#allocation5 + $0x58] sm:$0xff]
    %v102 = vld [vmem:[#allocation5 + $0x60] sm:$0xff]
    %v103 = vld [vmem:[#allocation5 + $0x68] sm:$0xff]
    %v104 = vld [vmem:[#allocation5 + $0x70] sm:$0xff]
    %v105 = vld [vmem:[#allocation5 + $0x78] sm:$0xff]
    %v106 = vld [vmem:[#allocation5 + $0x80] sm:$0xff]
    %v107 = vld [vmem:[#allocation5 + $0x88] sm:$0xff]
    %v108 = vld [vmem:[#allocation5 + $0x90] sm:$0xff]
    %v109 = vld [vmem:[#allocation5 + $0x98] sm:$0xff]
    %v110 = vld [vmem:[#allocation5 + $0xa0] sm:$0xff]
    %v111 = vld [vmem:[#allocation5 + $0xa8] sm:$0xff]
    %v112 = vld [vmem:[#allocation5 + $0xb0] sm:$0xff]
    %v113 = vld [vmem:[#allocation5 + $0xb8] sm:$0xff]
    %v114 = vld [vmem:[#allocation5 + $0xc0] sm:$0xff]
    %v115 = vld [vmem:[#allocation5 + $0xc8] sm:$0xff]
    %v116 = vld [vmem:[#allocation5 + $0xd0] sm:$0xff]
    %v117 = vld [vmem:[#allocation5 + $0xd8] sm:$0xff]
    %v118 = vld [vmem:[#allocation5 + $0xe0] sm:$0xff]
    %v119 = vld [vmem:[#allocation5 + $0xe8] sm:$0xff]
    %v120 = vld [vmem:[#allocation5 + $0xf0] sm:$0xff]
    %v121 = vld [vmem:[#allocation5 + $0xf8] sm:$0xff]
    %v122 = vld [vmem:[#allocation5 + $0x100] sm:$0xff]
    %v123 = vld [vmem:[#allocation5 + $0x108] sm:$0xff]
    %v124 = vld [vmem:[#allocation5 + $0x110] sm:$0xff]
    %v125 = vld [vmem:[#allocation5 + $0x118] sm:$0xff]
    %v126 = vld [vmem:[#allocation5 + $0x120] sm:$0xff]
    %v127 = vld [vmem:[#allocation5 + $0x128] sm:$0xff]
    %v128 = vld [vmem:[#allocation5 + $0x130] sm:$0xff]
    %v129 = vld [vmem:[#allocation5 + $0x138] sm:$0xff]
    %v130 = vld [vmem:[#allocation5 + $0x140] sm:$0xff]
    %v131 = vld [vmem:[#allocation5 + $0x148] sm:$0xff]
    %v132 = vld [vmem:[#allocation5 + $0x150] sm:$0xff]
    %v133 = vld [vmem:[#allocation5 + $0x158] sm:$0xff]
    %v134 = vld [vmem:[#allocation5 + $0x160] sm:$0xff]
    %v135 = vld [vmem:[#allocation5 + $0x168] sm:$0xff]
    %v136 = vld [vmem:[#allocation5 + $0x170] sm:$0xff]
    %v137 = vld [vmem:[#allocation5 + $0x178] sm:$0xff]
    %v138 = vld [vmem:[#allocation5 + $0x180] sm:$0xff]
    %v139 = vld [vmem:[#allocation5 + $0x188] sm:$0xff]
    %v140 = vld [vmem:[#allocation5 + $0x190] sm:$0xff]
    %v141 = vld [vmem:[#allocation5 + $0x198] sm:$0xff]
    %v142 = vld [vmem:[#allocation5 + $0x1a0] sm:$0xff]
    %v143 = vld [vmem:[#allocation5 + $0x1a8] sm:$0xff]
    %v144 = vld [vmem:[#allocation5 + $0x1b0] sm:$0xff]
    %v145 = vld [vmem:[#allocation5 + $0x1b8] sm:$0xff]
    %v146 = vld [vmem:[#allocation5 + $0x1c0] sm:$0xff]
    %v147 = vld [vmem:[#allocation5 + $0x1c8] sm:$0xff]
    %v148 = vld [vmem:[#allocation5 + $0x1d0] sm:$0xff]
    %v149 = vld [vmem:[#allocation5 + $0x1d8] sm:$0xff]
    %v150 = vld [vmem:[#allocation5 + $0x1e0] sm:$0xff]
    %v151 = vld [vmem:[#allocation5 + $0x1e8] sm:$0xff]
    %v152 = vld [vmem:[#allocation5 + $0x1f0] sm:$0xff]
    %v153 = vld [vmem:[#allocation5 + $0x1f8] sm:$0xff]
    %v154 = vld [vmem:[#allocation5 + $0x200] sm:$0xff]
    %v155 = vld [vmem:[#allocation5 + $0x208] sm:$0xff]
    %v156 = vld [vmem:[#allocation5 + $0x210] sm:$0xff]
    %v157 = vld [vmem:[#allocation5 + $0x218] sm:$0xff]
    %v158 = vld [vmem:[#allocation5 + $0x220] sm:$0xff]
    %v159 = vld [vmem:[#allocation5 + $0x228] sm:$0xff]
    %v160 = vld [vmem:[#allocation5 + $0x230] sm:$0xff]
    %v161 = vld [vmem:[#allocation5 + $0x238] sm:$0xff]
    %v162 = vld [vmem:[#allocation5 + $0x240] sm:$0xff]
    %v163 = vld [vmem:[#allocation5 + $0x248] sm:$0xff]
    %v164 = vld [vmem:[#allocation5 + $0x250] sm:$0xff]
    %v165 = vld [vmem:[#allocation5 + $0x258] sm:$0xff]
    %v166 = vld [vmem:[#allocation5 + $0x260] sm:$0xff]
    %v167 = vld [vmem:[#allocation5 + $0x268] sm:$0xff]
    %v168 = vld [vmem:[#allocation5 + $0x270] sm:$0xff]
    %v169 = vld [vmem:[#allocation5 + $0x278] sm:$0xff]
    %v170 = vld [vmem:[#allocation5 + $0x280] sm:$0xff]
    %v171 = vld [vmem:[#allocation5 + $0x288] sm:$0xff]
    %v172 = vld [vmem:[#allocation5 + $0x290] sm:$0xff]
    %v173 = vld [vmem:[#allocation5 + $0x298] sm:$0xff]
    %v174 = vld [vmem:[#allocation5 + $0x2a0] sm:$0xff]
    %v175 = vld [vmem:[#allocation5 + $0x2a8] sm:$0xff]
    %v176 = vld [vmem:[#allocation5 + $0x2b0] sm:$0xff]
    %v177 = vld [vmem:[#allocation5 + $0x2b8] sm:$0xff]
    %v178 = vld [vmem:[#allocation5 + $0x2c0] sm:$0xff]
    %v179 = vld [vmem:[#allocation5 + $0x2c8] sm:$0xff]
    %v180 = vld [vmem:[#allocation5 + $0x2d0] sm:$0xff]
    %v181 = vld [vmem:[#allocation5 + $0x2d8] sm:$0xff]
    %v182 = vld [vmem:[#allocation5 + $0x2e0] sm:$0xff]
    %v183 = vld [vmem:[#allocation5 + $0x2e8] sm:$0xff]
    %v184 = vld [vmem:[#allocation5 + $0x2f0] sm:$0xff]
    %v185 = vld [vmem:[#allocation5 + $0x2f8] sm:$0xff]
    %v186 = vld [vmem:[#allocation5 + $0x300] sm:$0xff]
    %v187 = vld [vmem:[#allocation5 + $0x308] sm:$0xff]
    %v188 = vld [vmem:[#allocation5 + $0x310] sm:$0xff]
    %v189 = vld [vmem:[#allocation5 + $0x318] sm:$0xff]
    %v190 = vld [vmem:[#allocation5 + $0x320] sm:$0xff]
    %v191 = vld [vmem:[#allocation5 + $0x328] sm:$0xff]
    %v192 = vld [vmem:[#allocation5 + $0x330] sm:$0xff]
    %v193 = vld [vmem:[#allocation5 + $0x338] sm:$0xff]
    %v194 = vld [vmem:[#allocation5 + $0x340] sm:$0xff]
    %v195 = vld [vmem:[#allocation5 + $0x348] sm:$0xff]
    %v196 = vld [vmem:[#allocation5 + $0x350] sm:$0xff]
    %v197 = vld [vmem:[#allocation5 + $0x358] sm:$0xff]
    %v198 = vld [vmem:[#allocation5 + $0x360] sm:$0xff]
    %v199 = vld [vmem:[#allocation5 + $0x368] sm:$0xff]
    %v200 = vld [vmem:[#allocation5 + $0x370] sm:$0xff]
    %v201 = vld [vmem:[#allocation5 + $0x378] sm:$0xff]
    %v202 = vld [vmem:[#allocation5 + $0x380] sm:$0xff]
    %v203 = vld [vmem:[#allocation5 + $0x388] sm:$0xff]
    %v204 = vld [vmem:[#allocation5 + $0x390] sm:$0xff]
    %v205 = vld [vmem:[#allocation5 + $0x398] sm:$0xff]
    %v206 = vld [vmem:[#allocation5 + $0x3a0] sm:$0xff]
    %v207 = vld [vmem:[#allocation5 + $0x3a8] sm:$0xff]
    %v208 = vld [vmem:[#allocation5 + $0x3b0] sm:$0xff]
    %v209 = vld [vmem:[#allocation5 + $0x3b8] sm:$0xff]
    %v210 = vld [vmem:[#allocation5 + $0x3c0] sm:$0xff]
    %v211 = vld [vmem:[#allocation5 + $0x3c8] sm:$0xff]
    %v212 = vld [vmem:[#allocation5 + $0x3d0] sm:$0xff]
    %v213 = vld [vmem:[#allocation5 + $0x3d8] sm:$0xff]
    %v214 = vld [vmem:[#allocation5 + $0x3e0] sm:$0xff]
    %v215 = vld [vmem:[#allocation5 + $0x3e8] sm:$0xff]
    %v216 = vld [vmem:[#allocation5 + $0x3f0] sm:$0xff]
    %v217 = vld [vmem:[#allocation5 + $0x3f8] sm:$0xff]
    %v218 = vld [vmem:[#allocation5 + $0x400] sm:$0xff]
    %v219 = vld [vmem:[#allocation5 + $0x408] sm:$0xff]
    %v220 = vld [vmem:[#allocation5 + $0x410] sm:$0xff]
    %v221 = vld [vmem:[#allocation5 + $0x418] sm:$0xff]
    %v222 = vld [vmem:[#allocation5 + $0x420] sm:$0xff]
    %v223 = vld [vmem:[#allocation5 + $0x428] sm:$0xff]
    %v224 = vld [vmem:[#allocation5 + $0x430] sm:$0xff]
    %v225 = vld [vmem:[#allocation5 + $0x438] sm:$0xff]
    %v226 = vld [vmem:[#allocation5 + $0x440] sm:$0xff]
    %v227 = vld [vmem:[#allocation5 + $0x448] sm:$0xff]
    %v228 = vld [vmem:[#allocation5 + $0x450] sm:$0xff]
    %v229 = vld [vmem:[#allocation5 + $0x458] sm:$0xff]
    %v230 = vld [vmem:[#allocation5 + $0x460] sm:$0xff]
    %v231 = vld [vmem:[#allocation5 + $0x468] sm:$0xff]
    %v232 = vld [vmem:[#allocation5 + $0x470] sm:$0xff]
    %v233 = vld [vmem:[#allocation5 + $0x478] sm:$0xff]
    %v234 = vld [vmem:[#allocation5 + $0x480] sm:$0xff]
    %v235 = vld [vmem:[#allocation5 + $0x488] sm:$0xff]
    %v236 = vld [vmem:[#allocation5 + $0x490] sm:$0xff]
    %v237 = vld [vmem:[#allocation5 + $0x498] sm:$0xff]
    %v238 = vld [vmem:[#allocation5 + $0x4a0] sm:$0xff]
    %v239 = vld [vmem:[#allocation5 + $0x4a8] sm:$0xff]
    %v240 = vld [vmem:[#allocation5 + $0x4b0] sm:$0xff]
    %v241 = vld [vmem:[#allocation5 + $0x4b8] sm:$0xff]
    %v242 = vld [vmem:[#allocation5 + $0x4c0] sm:$0xff]
    %v243 = vld [vmem:[#allocation5 + $0x4c8] sm:$0xff]
    %v244 = vld [vmem:[#allocation5 + $0x4d0] sm:$0xff]
    %v245 = vld [vmem:[#allocation5 + $0x4d8] sm:$0xff]
    %v246 = vld [vmem:[#allocation5 + $0x4e0] sm:$0xff]
    %v247 = vld [vmem:[#allocation5 + $0x4e8] sm:$0xff]
    %v248 = vld [vmem:[#allocation5 + $0x4f0] sm:$0xff]
    %v249 = vld [vmem:[#allocation5 + $0x4f8] sm:$0xff]
    %v250 = vld [vmem:[#allocation5 + $0x500] sm:$0xff]
    %v251 = vld [vmem:[#allocation5 + $0x508] sm:$0xff]
    %v252 = vld [vmem:[#allocation5 + $0x510] sm:$0xff]
    %v253 = vld [vmem:[#allocation5 + $0x518] sm:$0xff]
    %v254 = vld [vmem:[#allocation5 + $0x520] sm:$0xff]
    %v255 = vld [vmem:[#allocation5 + $0x528] sm:$0xff]
    %v256 = vld [vmem:[#allocation5 + $0x530] sm:$0xff]
    %v257 = vld [vmem:[#allocation5 + $0x538] sm:$0xff]
    %v258 = vld [vmem:[#allocation5 + $0x540] sm:$0xff]
    %v259 = vld [vmem:[#allocation5 + $0x548] sm:$0xff]
    %v260 = vld [vmem:[#allocation5 + $0x550] sm:$0xff]
    %v261 = vld [vmem:[#allocation5 + $0x558] sm:$0xff]
    %v262 = vld [vmem:[#allocation5 + $0x560] sm:$0xff]
    %v263 = vld [vmem:[#allocation5 + $0x568] sm:$0xff]
    %v264 = vld [vmem:[#allocation5 + $0x570] sm:$0xff]
    %v265 = vld [vmem:[#allocation5 + $0x578] sm:$0xff]
    %v266 = vld [vmem:[#allocation5 + $0x580] sm:$0xff]
    %v267 = vld [vmem:[#allocation5 + $0x588] sm:$0xff]
    %v268 = vld [vmem:[#allocation5 + $0x590] sm:$0xff]
    %v269 = vld [vmem:[#allocation5 + $0x598] sm:$0xff]
    %v270 = vld [vmem:[#allocation5 + $0x5a0] sm:$0xff]
    %v271 = vld [vmem:[#allocation5 + $0x5a8] sm:$0xff]
    %v272 = vld [vmem:[#allocation5 + $0x5b0] sm:$0xff]
    %v273 = vld [vmem:[#allocation5 + $0x5b8] sm:$0xff]
    %v274 = vld [vmem:[#allocation5 + $0x5c0] sm:$0xff]
    %v275 = vld [vmem:[#allocation5 + $0x5c8] sm:$0xff]
    %v276 = vld [vmem:[#allocation5 + $0x5d0] sm:$0xff]
    %v277 = vld [vmem:[#allocation5 + $0x5d8] sm:$0xff]
    %v278 = vld [vmem:[#allocation5 + $0x5e0] sm:$0xff]
    %v279 = vld [vmem:[#allocation5 + $0x5e8] sm:$0xff]
    %v280 = vld [vmem:[#allocation5 + $0x5f0] sm:$0xff]
    %v281 = vld [vmem:[#allocation5 + $0x5f8] sm:$0xff]
    %v282 = vld [vmem:[#allocation5 + $0x600] sm:$0xff]
    %v283 = vld [vmem:[#allocation5 + $0x608] sm:$0xff]
    %v284 = vld [vmem:[#allocation5 + $0x610] sm:$0xff]
    %v285 = vld [vmem:[#allocation5 + $0x618] sm:$0xff]
    %v286 = vld [vmem:[#allocation5 + $0x620] sm:$0xff]
    %v287 = vld [vmem:[#allocation5 + $0x628] sm:$0xff]
    %v288 = vld [vmem:[#allocation5 + $0x630] sm:$0xff]
    %v289 = vld [vmem:[#allocation5 + $0x638] sm:$0xff]
    %v290 = vld [vmem:[#allocation5 + $0x640] sm:$0xff]
    %v291 = vld [vmem:[#allocation5 + $0x648] sm:$0xff]
    %v292 = vld [vmem:[#allocation5 + $0x650] sm:$0xff]
    %v293 = vld [vmem:[#allocation5 + $0x658] sm:$0xff]
    %v294 = vld [vmem:[#allocation5 + $0x660] sm:$0xff]
    %v295 = vld [vmem:[#allocation5 + $0x668] sm:$0xff]
    %v296 = vld [vmem:[#allocation5 + $0x670] sm:$0xff]
    %v297 = vld [vmem:[#allocation5 + $0x678] sm:$0xff]
    %v298 = vld [vmem:[#allocation5 + $0x680] sm:$0xff]
    %v299 = vld [vmem:[#allocation5 + $0x688] sm:$0xff]
    %v300 = vld [vmem:[#allocation5 + $0x690] sm:$0xff]
    %v301 = vld [vmem:[#allocation5 + $0x698] sm:$0xff]
    %v302 = vld [vmem:[#allocation5 + $0x6a0] sm:$0xff]
    %v303 = vld [vmem:[#allocation5 + $0x6a8] sm:$0xff]
    %v304 = vld [vmem:[#allocation5 + $0x6b0] sm:$0xff]
    %v305 = vld [vmem:[#allocation5 + $0x6b8] sm:$0xff]
    %v306 = vld [vmem:[#allocation5 + $0x6c0] sm:$0xff]
    %v307 = vld [vmem:[#allocation5 + $0x6c8] sm:$0xff]
    %v308 = vld [vmem:[#allocation5 + $0x6d0] sm:$0xff]
    %v309 = vld [vmem:[#allocation5 + $0x6d8] sm:$0xff]
    %v310 = vld [vmem:[#allocation5 + $0x6e0] sm:$0xff]
    %v311 = vld [vmem:[#allocation5 + $0x6e8] sm:$0xff]
    %v312 = vld [vmem:[#allocation5 + $0x6f0] sm:$0xff]
    %v313 = vld [vmem:[#allocation5 + $0x6f8] sm:$0xff]
    %v314 = vld [vmem:[#allocation7] sm:$0x3]
    %v316 = vlaneseq
    %v317 = vshrl.u32 %v316, 7
    %v318 = vsub.s32 0, %v317
    %v319 = vrot.slane %v314, %v318
    %v320 = vlaneseq
    %v321 = vshrl.u32 %v320, 7
    %v322 = vsub.s32 1, %v321
    %v323 = vrot.slane %v314, %v322
    %326 = vmatprep.subr.mxu0 %v91
    %327 = vmatpush1.msra.mxu0 %v90
    %328 = vmatprep.subr.mxu0 %v93
    %329 = vmatpush1.msra.mxu0 %v92
    %330 = vmatprep.subr.mxu0 %v95
    %331 = vmatpush1.msra.mxu0 %v94
    %332 = vmatprep.subr.mxu0 %v97
    %333 = vmatpush1.msra.mxu0 %v96
    %334 = vmatprep.subr.mxu0 %v99
    %335 = vmatpush1.msra.mxu0 %v98
    %336 = vmatprep.subr.mxu0 %v101
    %337 = vmatpush1.msra.mxu0 %v100
    %338 = vmatprep.subr.mxu0 %v103
    %339 = vmatpush1.msra.mxu0 %v102
    %340 = vmatprep.subr.mxu0 %v105
    %341 = vmatpush1.msra.mxu0 %v104
    %342 = vmatprep.subr.mxu0 %v107
    %343 = vmatpush1.msra.mxu0 %v106
    %344 = vmatprep.subr.mxu0 %v109
    %345 = vmatpush1.msra.mxu0 %v108
    %346 = vmatprep.subr.mxu0 %v111
    %347 = vmatpush1.msra.mxu0 %v110
    %348 = vmatprep.subr.mxu0 %v113
    %349 = vmatpush1.msra.mxu0 %v112
    %350 = vmatprep.subr.mxu0 %v115
    %351 = vmatpush1.msra.mxu0 %v114
    %352 = vmatprep.subr.mxu0 %v117
    %353 = vmatpush1.msra.mxu0 %v116
    %354 = vmatprep.subr.mxu0 %v119
    %355 = vmatpush1.msra.mxu0 %v118
    %356 = vmatprep.subr.mxu0 %v121
    %357 = vmatpush1.msra.mxu0 %v120
    %358 = vmatprep.subr.mxu0 %v123
    %359 = vmatpush1.msra.mxu0 %v122
    %360 = vmatprep.subr.mxu0 %v125
    %361 = vmatpush1.msra.mxu0 %v124
    %362 = vmatprep.subr.mxu0 %v127
    %363 = vmatpush1.msra.mxu0 %v126
    %364 = vmatprep.subr.mxu0 %v129
    %365 = vmatpush1.msra.mxu0 %v128
    %366 = vmatprep.subr.mxu0 %v131
    %367 = vmatpush1.msra.mxu0 %v130
    %368 = vmatprep.subr.mxu0 %v133
    %369 = vmatpush1.msra.mxu0 %v132
    %370 = vmatprep.subr.mxu0 %v135
    %371 = vmatpush1.msra.mxu0 %v134
    %372 = vmatprep.subr.mxu0 %v137
    %373 = vmatpush1.msra.mxu0 %v136
    %374 = vmatprep.subr.mxu0 %v139
    %375 = vmatpush1.msra.mxu0 %v138
    %376 = vmatprep.subr.mxu0 %v141
    %377 = vmatpush1.msra.mxu0 %v140
    %378 = vmatprep.subr.mxu0 %v143
    %379 = vmatpush1.msra.mxu0 %v142
    %380 = vmatprep.subr.mxu0 %v145
    %381 = vmatpush1.msra.mxu0 %v144
    %382 = vmatprep.subr.mxu0 %v147
    %383 = vmatpush1.msra.mxu0 %v146
    %384 = vmatprep.subr.mxu0 %v149
    %385 = vmatpush1.msra.mxu0 %v148
    %386 = vmatprep.subr.mxu0 %v151
    %387 = vmatpush1.msra.mxu0 %v150
    %388 = vmatprep.subr.mxu0 %v153
    %389 = vmatpush1.msra.mxu0 %v152
    %390 = vmatprep.mubr.f32.mxu0 %v84
    %391 = vmatmul.mubr.f32.gmra.mrb[0].mxu0 %v83
    %v392 = vpop.f32.mrb[0].mxu0
    %v393 = vadd.f32 %v319, %v392
    %v394 = vpop.f32.mrb[0].mxu0
    %v395 = vadd.f32 %v323, %v394
    %396 = vdwg.mxu0
    %397 = vmatprep.subr.mxu0 %v155
    %398 = vmatpush1.msra.mxu0 %v154
    %399 = vmatprep.subr.mxu0 %v157
    %400 = vmatpush1.msra.mxu0 %v156
    %401 = vmatprep.subr.mxu0 %v159
    %402 = vmatpush1.msra.mxu0 %v158
    %403 = vmatprep.subr.mxu0 %v161
    %404 = vmatpush1.msra.mxu0 %v160
    %405 = vmatprep.subr.mxu0 %v163
    %406 = vmatpush1.msra.mxu0 %v162
    %407 = vmatprep.subr.mxu0 %v165
    %408 = vmatpush1.msra.mxu0 %v164
    %409 = vmatprep.subr.mxu0 %v167
    %410 = vmatpush1.msra.mxu0 %v166
    %411 = vmatprep.subr.mxu0 %v169
    %412 = vmatpush1.msra.mxu0 %v168
    %413 = vmatprep.subr.mxu0 %v171
    %414 = vmatpush1.msra.mxu0 %v170
    %415 = vmatprep.subr.mxu0 %v173
    %416 = vmatpush1.msra.mxu0 %v172
    %417 = vmatprep.subr.mxu0 %v175
    %418 = vmatpush1.msra.mxu0 %v174
    %419 = vmatprep.subr.mxu0 %v177
    %420 = vmatpush1.msra.mxu0 %v176
    %421 = vmatprep.subr.mxu0 %v179
    %422 = vmatpush1.msra.mxu0 %v178
    %423 = vmatprep.subr.mxu0 %v181
    %424 = vmatpush1.msra.mxu0 %v180
    %425 = vmatprep.subr.mxu0 %v183
    %426 = vmatpush1.msra.mxu0 %v182
    %427 = vmatprep.subr.mxu0 %v185
    %428 = vmatpush1.msra.mxu0 %v184
    %429 = vmatprep.subr.mxu0 %v187
    %430 = vmatpush1.msra.mxu0 %v186
    %431 = vmatprep.subr.mxu0 %v189
    %432 = vmatpush1.msra.mxu0 %v188
    %433 = vmatprep.subr.mxu0 %v191
    %434 = vmatpush1.msra.mxu0 %v190
    %435 = vmatprep.subr.mxu0 %v193
    %436 = vmatpush1.msra.mxu0 %v192
    %437 = vmatprep.subr.mxu0 %v195
    %438 = vmatpush1.msra.mxu0 %v194
    %439 = vmatprep.subr.mxu0 %v197
    %440 = vmatpush1.msra.mxu0 %v196
    %441 = vmatprep.subr.mxu0 %v199
    %442 = vmatpush1.msra.mxu0 %v198
    %443 = vmatprep.subr.mxu0 %v201
    %444 = vmatpush1.msra.mxu0 %v200
    %445 = vmatprep.subr.mxu0 %v203
    %446 = vmatpush1.msra.mxu0 %v202
    %447 = vmatprep.subr.mxu0 %v205
    %448 = vmatpush1.msra.mxu0 %v204
    %449 = vmatprep.subr.mxu0 %v207
    %450 = vmatpush1.msra.mxu0 %v206
    %451 = vmatprep.subr.mxu0 %v209
    %452 = vmatpush1.msra.mxu0 %v208
    %453 = vmatprep.subr.mxu0 %v211
    %454 = vmatpush1.msra.mxu0 %v210
    %455 = vmatprep.subr.mxu0 %v213
    %456 = vmatpush1.msra.mxu0 %v212
    %457 = vmatprep.subr.mxu0 %v215
    %458 = vmatpush1.msra.mxu0 %v214
    %459 = vmatprep.subr.mxu0 %v217
    %460 = vmatpush1.msra.mxu0 %v216
    %461 = vmatprep.mubr.f32.mxu0 %v86
    %462 = vmatmul.mubr.f32.gmra.mrb[0].mxu0 %v85
    %v463 = vpop.f32.mrb[0].mxu0
    %v464 = vadd.f32 %v393, %v463
    %v465 = vpop.f32.mrb[0].mxu0
    %v466 = vadd.f32 %v395, %v465
    %467 = vdwg.mxu0
    %468 = vmatprep.subr.mxu0 %v219
    %469 = vmatpush1.msra.mxu0 %v218
    %470 = vmatprep.subr.mxu0 %v221
    %471 = vmatpush1.msra.mxu0 %v220
    %472 = vmatprep.subr.mxu0 %v223
    %473 = vmatpush1.msra.mxu0 %v222
    %474 = vmatprep.subr.mxu0 %v225
    %475 = vmatpush1.msra.mxu0 %v224
    %476 = vmatprep.subr.mxu0 %v227
    %477 = vmatpush1.msra.mxu0 %v226
    %478 = vmatprep.subr.mxu0 %v229
    %479 = vmatpush1.msra.mxu0 %v228
    %480 = vmatprep.subr.mxu0 %v231
    %481 = vmatpush1.msra.mxu0 %v230
    %482 = vmatprep.subr.mxu0 %v233
    %483 = vmatpush1.msra.mxu0 %v232
    %484 = vmatprep.subr.mxu0 %v235
    %485 = vmatpush1.msra.mxu0 %v234
    %486 = vmatprep.subr.mxu0 %v237
    %487 = vmatpush1.msra.mxu0 %v236
    %488 = vmatprep.subr.mxu0 %v239
    %489 = vmatpush1.msra.mxu0 %v238
    %490 = vmatprep.subr.mxu0 %v241
    %491 = vmatpush1.msra.mxu0 %v240
    %492 = vmatprep.subr.mxu0 %v243
    %493 = vmatpush1.msra.mxu0 %v242
    %494 = vmatprep.subr.mxu0 %v245
    %495 = vmatpush1.msra.mxu0 %v244
    %496 = vmatprep.subr.mxu0 %v247
    %497 = vmatpush1.msra.mxu0 %v246
    %498 = vmatprep.subr.mxu0 %v249
    %499 = vmatpush1.msra.mxu0 %v248
    %500 = vmatprep.subr.mxu0 %v251
    %501 = vmatpush1.msra.mxu0 %v250
    %502 = vmatprep.subr.mxu0 %v253
    %503 = vmatpush1.msra.mxu0 %v252
    %504 = vmatprep.subr.mxu0 %v255
    %505 = vmatpush1.msra.mxu0 %v254
    %506 = vmatprep.subr.mxu0 %v257
    %507 = vmatpush1.msra.mxu0 %v256
    %508 = vmatprep.subr.mxu0 %v259
    %509 = vmatpush1.msra.mxu0 %v258
    %510 = vmatprep.subr.mxu0 %v261
    %511 = vmatpush1.msra.mxu0 %v260
    %512 = vmatprep.subr.mxu0 %v263
    %513 = vmatpush1.msra.mxu0 %v262
    %514 = vmatprep.subr.mxu0 %v265
    %515 = vmatpush1.msra.mxu0 %v264
    %516 = vmatprep.subr.mxu0 %v267
    %517 = vmatpush1.msra.mxu0 %v266
    %518 = vmatprep.subr.mxu0 %v269
    %519 = vmatpush1.msra.mxu0 %v268
    %520 = vmatprep.subr.mxu0 %v271
    %521 = vmatpush1.msra.mxu0 %v270
    %522 = vmatprep.subr.mxu0 %v273
    %523 = vmatpush1.msra.mxu0 %v272
    %524 = vmatprep.subr.mxu0 %v275
    %525 = vmatpush1.msra.mxu0 %v274
    %526 = vmatprep.subr.mxu0 %v277
    %527 = vmatpush1.msra.mxu0 %v276
    %528 = vmatprep.subr.mxu0 %v279
    %529 = vmatpush1.msra.mxu0 %v278
    %530 = vmatprep.subr.mxu0 %v281
    %531 = vmatpush1.msra.mxu0 %v280
    %532 = vmatprep.mubr.f32.mxu0 %v88
    %533 = vmatmul.mubr.f32.gmra.mrb[0].mxu0 %v87
    %v534 = vpop.f32.mrb[0].mxu0
    %v535 = vadd.f32 %v464, %v534
    %v536 = vpop.f32.mrb[0].mxu0
    %v537 = vadd.f32 %v466, %v536
    %538 = vdwg.mxu0
    %539 = vmatprep.subr.mxu0 %v283
    %540 = vmatpush1.msra.mxu0 %v282
    %541 = vmatprep.subr.mxu0 %v285
    %542 = vmatpush1.msra.mxu0 %v284
    %543 = vmatprep.subr.mxu0 %v287
    %544 = vmatpush1.msra.mxu0 %v286
    %545 = vmatprep.subr.mxu0 %v289
    %546 = vmatpush1.msra.mxu0 %v288
    %547 = vmatprep.subr.mxu0 %v291
    %548 = vmatpush1.msra.mxu0 %v290
    %549 = vmatprep.subr.mxu0 %v293
    %550 = vmatpush1.msra.mxu0 %v292
    %551 = vmatprep.subr.mxu0 %v295
    %552 = vmatpush1.msra.mxu0 %v294
    %553 = vmatprep.subr.mxu0 %v297
    %554 = vmatpush1.msra.mxu0 %v296
    %555 = vmatprep.subr.mxu0 %v299
    %556 = vmatpush1.msra.mxu0 %v298
    %557 = vmatprep.subr.mxu0 %v301
    %558 = vmatpush1.msra.mxu0 %v300
    %559 = vmatprep.subr.mxu0 %v303
    %560 = vmatpush1.msra.mxu0 %v302
    %561 = vmatprep.subr.mxu0 %v305
    %562 = vmatpush1.msra.mxu0 %v304
    %563 = vmatprep.subr.mxu0 %v307
    %564 = vmatpush1.msra.mxu0 %v306
    %565 = vmatprep.subr.mxu0 %v309
    %566 = vmatpush1.msra.mxu0 %v308
    %567 = vmatprep.subr.mxu0 %v311
    %568 = vmatpush1.msra.mxu0 %v310
    %569 = vmatprep.subr.mxu0 %v313
    %570 = vmatpush1.msra.mxu0 %v312
    %571 = vmatprep.subr.mxu0 0.0
    %572 = vmatpush1.msra.mxu0 0.0
    %573 = vmatprep.subr.mxu0 0.0
    %574 = vmatpush1.msra.mxu0 0.0
    %575 = vmatprep.subr.mxu0 0.0
    %576 = vmatpush1.msra.mxu0 0.0
    %577 = vmatprep.subr.mxu0 0.0
    %578 = vmatpush1.msra.mxu0 0.0
    %579 = vmatprep.subr.mxu0 0.0
    %580 = vmatpush1.msra.mxu0 0.0
    %581 = vmatprep.subr.mxu0 0.0
    %582 = vmatpush1.msra.mxu0 0.0
    %583 = vmatprep.subr.mxu0 0.0
    %584 = vmatpush1.msra.mxu0 0.0
    %585 = vmatprep.subr.mxu0 0.0
    %586 = vmatpush1.msra.mxu0 0.0
    %587 = vmatprep.subr.mxu0 0.0
    %588 = vmatpush1.msra.mxu0 0.0
    %589 = vmatprep.subr.mxu0 0.0
    %590 = vmatpush1.msra.mxu0 0.0
    %591 = vmatprep.subr.mxu0 0.0
    %592 = vmatpush1.msra.mxu0 0.0
    %593 = vmatprep.subr.mxu0 0.0
    %594 = vmatpush1.msra.mxu0 0.0
    %595 = vmatprep.subr.mxu0 0.0
    %596 = vmatpush1.msra.mxu0 0.0
    %597 = vmatprep.subr.mxu0 0.0
    %598 = vmatpush1.msra.mxu0 0.0
    %599 = vmatprep.subr.mxu0 0.0
    %600 = vmatpush1.msra.mxu0 0.0
    %601 = vmatprep.subr.mxu0 0.0
    %602 = vmatpush1.msra.mxu0 0.0
    %603 = vmatprep.mubr.f32.mxu0 0.0
    %604 = vmatmul.mubr.f32.gmra.mrb[0].mxu0 %v89
    %v605 = vpop.f32.mrb[0].mxu0
    %v606 = vadd.f32 %v535, %v605
    %v607 = vpop.f32.mrb[0].mxu0
    %v608 = vadd.f32 %v537, %v607
    %609 = vdwg.mxu0
    %v610 = vmax.f32 %v606, 0.0
    %v611 = vmax.f32 %v608, 0.0
    %v612 = vld [vmem:[#allocation8] sm:$0xff]
    %v613 = vld [vmem:[#allocation8 + $0x8] sm:$0xff]
    %v614 = vld [vmem:[#allocation8 + $0x10] sm:$0xff]
    %v615 = vld [vmem:[#allocation8 + $0x18] sm:$0xff]
    %v616 = vld [vmem:[#allocation8 + $0x20] sm:$0xff]
    %v617 = vld [vmem:[#allocation8 + $0x28] sm:$0xff]
    %v618 = vld [vmem:[#allocation8 + $0x30] sm:$0xff]
    %v619 = vld [vmem:[#allocation8 + $0x38] sm:$0xff]
    %v620 = vld [vmem:[#allocation8 + $0x40] sm:$0xff]
    %v621 = vld [vmem:[#allocation8 + $0x48] sm:$0xff]
    %v622 = vld [vmem:[#allocation8 + $0x50] sm:$0xff]
    %v623 = vld [vmem:[#allocation8 + $0x58] sm:$0xff]
    %v624 = vld [vmem:[#allocation8 + $0x60] sm:$0xff]
    %v625 = vld [vmem:[#allocation8 + $0x68] sm:$0xff]
    %v626 = vld [vmem:[#allocation8 + $0x70] sm:$0xff]
    %v627 = vld [vmem:[#allocation8 + $0x78] sm:$0xff]
    %v628 = vld [vmem:[#allocation8 + $0x80] sm:$0xff]
    %v629 = vld [vmem:[#allocation8 + $0x88] sm:$0xff]
    %v630 = vld [vmem:[#allocation8 + $0x90] sm:$0xff]
    %v631 = vld [vmem:[#allocation8 + $0x98] sm:$0xff]
    %v632 = vld [vmem:[#allocation8 + $0xa0] sm:$0xff]
    %v633 = vld [vmem:[#allocation8 + $0xa8] sm:$0xff]
    %v634 = vld [vmem:[#allocation8 + $0xb0] sm:$0xff]
    %v635 = vld [vmem:[#allocation8 + $0xb8] sm:$0xff]
    %v636 = vld [vmem:[#allocation8 + $0xc0] sm:$0xff]
    %v637 = vld [vmem:[#allocation8 + $0xc8] sm:$0xff]
    %v638 = vld [vmem:[#allocation8 + $0xd0] sm:$0xff]
    %v639 = vld [vmem:[#allocation8 + $0xd8] sm:$0xff]
    %v640 = vld [vmem:[#allocation10] sm:$0x1]
    %v642 = vlaneseq
    %v643 = vshrl.u32 %v642, 7
    %v644 = vsub.s32 0, %v643
    %v645 = vrot.slane %v640, %v644
    %vm647 = vcmask 785408
    %v649 = vsel %vm647, %v611, 0
    %651 = vmatprep.subr.mxu0 0.0
    %652 = vmatpush1.msra.mxu0 %v612
    %653 = vmatprep.subr.mxu0 0.0
    %654 = vmatpush1.msra.mxu0 %v613
    %655 = vmatprep.subr.mxu0 0.0
    %656 = vmatpush1.msra.mxu0 %v614
    %657 = vmatprep.subr.mxu0 0.0
    %658 = vmatpush1.msra.mxu0 %v615
    %659 = vmatprep.subr.mxu0 0.0
    %660 = vmatpush1.msra.mxu0 %v616
    %661 = vmatprep.subr.mxu0 0.0
    %662 = vmatpush1.msra.mxu0 %v617
    %663 = vmatprep.subr.mxu0 0.0
    %664 = vmatpush1.msra.mxu0 %v618
    %665 = vmatprep.subr.mxu0 0.0
    %666 = vmatpush1.msra.mxu0 %v619
    %667 = vmatprep.subr.mxu0 0.0
    %668 = vmatpush1.msra.mxu0 %v620
    %669 = vmatprep.subr.mxu0 0.0
    %670 = vmatpush1.msra.mxu0 %v621
    %671 = vmatprep.subr.mxu0 0.0
    %672 = vmatpush1.msra.mxu0 %v622
    %673 = vmatprep.subr.mxu0 0.0
    %674 = vmatpush1.msra.mxu0 %v623
    %675 = vmatprep.subr.mxu0 0.0
    %676 = vmatpush1.msra.mxu0 %v624
    %677 = vmatprep.subr.mxu0 0.0
    %678 = vmatpush1.msra.mxu0 %v625
    %679 = vmatprep.subr.mxu0 0.0
    %680 = vmatpush1.msra.mxu0 %v626
    %681 = vmatprep.subr.mxu0 0.0
    %682 = vmatpush1.msra.mxu0 %v627
    %683 = vmatprep.subr.mxu0 0.0
    %684 = vmatpush1.msra.mxu0 %v628
    %685 = vmatprep.subr.mxu0 0.0
    %686 = vmatpush1.msra.mxu0 %v629
    %687 = vmatprep.subr.mxu0 0.0
    %688 = vmatpush1.msra.mxu0 %v630
    %689 = vmatprep.subr.mxu0 0.0
    %690 = vmatpush1.msra.mxu0 %v631
    %691 = vmatprep.subr.mxu0 0.0
    %692 = vmatpush1.msra.mxu0 %v632
    %693 = vmatprep.subr.mxu0 0.0
    %694 = vmatpush1.msra.mxu0 %v633
    %695 = vmatprep.subr.mxu0 0.0
    %696 = vmatpush1.msra.mxu0 %v634
    %697 = vmatprep.subr.mxu0 0.0
    %698 = vmatpush1.msra.mxu0 %v635
    %699 = vmatprep.subr.mxu0 0.0
    %700 = vmatpush1.msra.mxu0 %v636
    %701 = vmatprep.subr.mxu0 0.0
    %702 = vmatpush1.msra.mxu0 %v637
    %703 = vmatprep.subr.mxu0 0.0
    %704 = vmatpush1.msra.mxu0 %v638
    %705 = vmatprep.subr.mxu0 0.0
    %706 = vmatpush1.msra.mxu0 %v639
    %707 = vmatprep.subr.mxu0 0.0
    %708 = vmatpush1.msra.mxu0 0.0
    %709 = vmatprep.subr.mxu0 0.0
    %710 = vmatpush1.msra.mxu0 0.0
    %711 = vmatprep.subr.mxu0 0.0
    %712 = vmatpush1.msra.mxu0 0.0
    %713 = vmatprep.subr.mxu0 0.0
    %714 = vmatpush1.msra.mxu0 0.0
    %715 = vmatprep.mubr.f32.mxu0 %v649
    %716 = vmatmul.mubr.f32.gmra.mrb[0].mxu0 %v610
    %v717 = vpop.f32.mrb[0].mxu0
    %v718 = vadd.f32 %v645, %v717
    %v719 = vpop.f32.mrb[0].mxu0
    %720 = vdwg.mxu0
    %vm721 = vcmask 15360
    %v722 = vsel %vm721, %v718, -inf
    %723 = vmax.xlane.f32.xlu0 %v722
    %v724 = vpop.xlane.xlu0 %723
    %v725 = vsub.f32 %v718, %v724
    %v726 = vmul.f32 %v725, 1.442695
    %v727 = vpow.pop %v726
    %v728 = vsel %vm721, %v727, 0.0
    %729 = vadd.xlane.f32.xlu0 %v728
    %v730 = vpop.xlane.xlu0 %729
    %v731 = vrcp.pop %v730
    %v732 = vmul.f32 %v727, %v731
    %733 = vst.msk [vmem:[#allocation11] sm:$0xff] %vm721, %v732
    // Predicated region
    $region42: #{domain_critic_forward.1} parent=1 // pred_check
      _
    $region43: #{domain_critic_forward.1} parent=1 // pred_check_branch
      %735 = sbr.rel (0) target = $region45
    $region44: #{domain_critic_forward.1} parent=1 // pred_region
      %s737 = ssub.s32 128, 128
      %738 = vsyncadd [#allocation4], %s737
      %s740 = sshll.u32 [#allocation11], 4
      %s741 = int_to_ptr.vmem [resolvable:$true] %s740
      %743 = dma.vmem_to_hbm [thread:$0]  %s741, 128, %s5, [#allocation4]
    $region45: #{domain_critic_forward.1} parent=1 // pred_fallthru
      _
    // Predicated region
    $region46: #{domain_critic_forward.1} parent=1 // pred_check
      _
    $region47: #{domain_critic_forward.1} parent=1 // pred_check_branch
      %745 = sbr.rel (0) target = $region49
    $region48: #{domain_critic_forward.1} parent=1 // pred_region
      %746 = dma.done [#allocation4], 128
    $region49: #{domain_critic_forward.1} parent=1 // pred_fallthru
      _
    %747 = vsyncpa [#allocation3], 1
    %748 = vsyncpa [#allocation6], 1
    %749 = vsyncpa [#allocation9], 1
    %750 = vsyncpa [#allocation4], 1

</llo_original>
